<compile_context>
chip_gen: v5e
topology: v5e:2x2
jax: 0.10.0
libtpu: 0.0.40
codegen_flags: <defaults>
</compile_context>

<pallas_src>
import math

import jax
import jax.numpy as jnp
from jax import lax
from jax.experimental import pallas as pl
from jax.experimental.pallas import tpu as pltpu

_MU_CLIP = math.sqrt(2.0)      # sqrt(self.C), C = 2.0
_DEFAULT_TV = 512              # default vocab tile (rows of mu_v per step)
_VMEM_BUDGET = 28 * (1 << 20)  # keeps double-buffered blocks comfortably in VMEM


# --------------------------------------------------------------------------- #
# helpers
# --------------------------------------------------------------------------- #
def _clip_cast(v, mxu_dtype):
    """clamp(mu) in f32, then (optionally) stage for the MXU in mxu_dtype."""
    v = jnp.clip(v.astype(jnp.float32), -_MU_CLIP, _MU_CLIP)
    return v if mxu_dtype is None else v.astype(mxu_dtype)


def _group_logits(mu_v_ref, muc_all, *, Cv, C, T, mxu_dtype):
    """Per-group logits for the current vocab tile, each (tile, T) in f32."""
    dn = (((1,), (1,)), ((), ()))
    if Cv == 1:
        muv = _clip_cast(mu_v_ref[0], mxu_dtype)                       # (tile, E)
        wide = lax.dot_general(muv, muc_all, dn,
                               preferred_element_type=jnp.float32)     # (tile, C*T)
        if C == 1:
            return [wide]
        return [wide[:, c * T:(c + 1) * T] for c in range(C)]
    return [lax.dot_general(_clip_cast(mu_v_ref[c], mxu_dtype),
                            muc_all[c * T:(c + 1) * T], dn,
                            preferred_element_type=jnp.float32)
            for c in range(C)]


def _vmem_bytes(Cv, tv, E, CT, T, N):
    io_blocks = 2 * 4 * (Cv * tv * E + CT * E + T * N + tv * N)   # 2x-buffered blocks
    temps = 4 * (2 * tv * CT + 2 * tv * N + T * N + 8 * CT)       # logits/exp/p/outs
    return io_blocks + temps


def _vmem_limit_bytes(est):
    return int(min(max(est + est // 4 + (1 << 20), 32 << 20), 48 << 20))


def _select_tile(Cv, V, E, CT, T, N, tv_req):
    """Pick the vocab tile: (tile_rows, single_tile?, vmem_limit_bytes)."""
    tv_req = max(8, int(tv_req))
    if tv_req >= V and _vmem_bytes(Cv, V, E, CT, T, N) <= _VMEM_BUDGET:
        return V, True, _vmem_limit_bytes(_vmem_bytes(Cv, V, E, CT, T, N))
    tv = max(8, (min(tv_req, V) // 8) * 8)
    while tv > 8 and _vmem_bytes(Cv, tv, E, CT, T, N) > _VMEM_BUDGET:
        tv = max(8, (tv // 16) * 8)
    return tv, False, _vmem_limit_bytes(_vmem_bytes(Cv, tv, E, CT, T, N))


# --------------------------------------------------------------------------- #
# kernels
# --------------------------------------------------------------------------- #
def _make_single_tile_kernel(Cv, C, T, B, mxu_dtype):
    """Whole V in one step: fused clamp + logits + softmax + projection."""

    def kernel(mu_v_ref, mu_c_ref, x_ref, o_ref):
        muc = _clip_cast(mu_c_ref[...], mxu_dtype)                     # (C*T, E)
        lgs = _group_logits(mu_v_ref, muc, Cv=Cv, C=C, T=T, mxu_dtype=mxu_dtype)
        x_all = x_ref[...]
        if mxu_dtype is not None:
            x_all = x_all.astype(mxu_dtype)
        for c in range(C):
            lg = lgs[c]                                                # (V, T) f32
            m = lg.max(axis=0, keepdims=True)                          # (1, T)
            e = jnp.exp(lg - m)
            p = e * (1.0 / e.sum(axis=0, keepdims=True))               # softmax over V
            if mxu_dtype is not None:
                p = p.astype(mxu_dtype)
            out_c = jnp.dot(p, x_all[:, c * B:(c + 1) * B],
                            preferred_element_type=jnp.float32)        # (V, B)
            if C == 1:
                o_ref[...] = out_c.astype(o_ref.dtype)
            else:
                o_ref[:, c * B:(c + 1) * B] = out_c.astype(o_ref.dtype)

    return kernel


def _make_tiled_kernel(Cv, C, T, B, V, tv, mxu_dtype):
    """grid = (2, grid_v): phase 0 = online-softmax stats, phase 1 = apply."""
    needs_mask = (V % tv) != 0

    def kernel(mu_v_ref, mu_c_ref, x_ref, o_ref, m_ref, z_ref):
        ph = pl.program_id(0)       # 0: stats sweep, 1: apply sweep
        i = pl.program_id(1)        # vocab-tile index
        muc = _clip_cast(mu_c_ref[...], mxu_dtype)                     # (C*T, E)
        lgs = _group_logits(mu_v_ref, muc, Cv=Cv, C=C, T=T, mxu_dtype=mxu_dtype)

        @pl.when((ph == 0) & (i == 0))
        def _init():
            m_ref[...] = jnp.full(m_ref.shape, -jnp.inf, jnp.float32)
            z_ref[...] = jnp.zeros(z_ref.shape, jnp.float32)

        @pl.when(ph == 0)
        def _stats():
            if needs_mask:
                row = i * tv + lax.broadcasted_iota(jnp.int32, (tv, T), 0)
                valid = row < V
            for c in range(C):
                lg = lgs[c]                                            # (tv, T)
                if needs_mask:
                    lg = jnp.where(valid, lg, -jnp.inf)
                m_old = m_ref[c]                                       # (1, T)
                m_new = jnp.maximum(m_old, lg.max(axis=0, keepdims=True))
                z_ref[c] = (z_ref[c] * jnp.exp(m_old - m_new)
                            + jnp.exp(lg - m_new).sum(axis=0, keepdims=True))
                m_ref[c] = m_new

        @pl.when(ph == 1)
        def _apply():
            x_all = x_ref[...]
            if mxu_dtype is not None:
                x_all = x_all.astype(mxu_dtype)
            for c in range(C):
                p = jnp.exp(lgs[c] - m_ref[c]) * (1.0 / z_ref[c])      # (tv, T)
                if mxu_dtype is not None:
                    p = p.astype(mxu_dtype)
                out_c = jnp.dot(p, x_all[:, c * B:(c + 1) * B],
                                preferred_element_type=jnp.float32)    # (tv, B)
                if C == 1:
                    o_ref[...] = out_c.astype(o_ref.dtype)
                else:
                    o_ref[:, c * B:(c + 1) * B] = out_c.astype(o_ref.dtype)

    return kernel


# --------------------------------------------------------------------------- #
# pallas_call wrapper
# --------------------------------------------------------------------------- #
def _fused_softmax_project(mu_v_g, mu_c_s, x, *, C, T, tv, mxu_dtype):
    """out[:, c*B:(c+1)*B] = softmax_V(clip(mu_v[c]) @ clip(mu_c[c]).T) @ x[:, c*B:(c+1)*B].

    mu_v_g : (Cv, V, E), Cv in {1, C}  (Cv == 1 -> shared across groups)
    mu_c_s : (C*T, E)   groups stacked along the row axis
    x      : (T, N)     N = C*B (columns already grouped, torch layout)
    returns (V, N)      torch output layout (lane-dense last dim)
    """
    Cv, V, E = mu_v_g.shape
    CT = mu_c_s.shape[0]
    N = x.shape[1]
    B = N // C
    out_dtype = x.dtype

    tv_eff, single, vmem_limit = _select_tile(Cv, V, E, CT, T, N, tv)
    cparams = pltpu.CompilerParams(vmem_limit_bytes=vmem_limit,
                                   dimension_semantics=("arbitrary",) if single
                                   else ("arbitrary", "arbitrary"))

    if single:
        kernel = _make_single_tile_kernel(Cv, C, T, B, mxu_dtype)
        return pl.pallas_call(
            kernel,
            out_shape=jax.ShapeDtypeStruct((V, N), out_dtype),
            grid_spec=pltpu.PrefetchScalarGridSpec(
                num_scalar_prefetch=0,
                grid=(1,),
                in_specs=[pl.BlockSpec((Cv, V, E), lambda i: (0, 0, 0)),
                          pl.BlockSpec((CT, E), lambda i: (0, 0)),
                          pl.BlockSpec((T, N), lambda i: (0, 0))],
                out_specs=pl.BlockSpec((V, N), lambda i: (0, 0))),
            compiler_params=cparams,
        )(mu_v_g, mu_c_s, x)

    grid_v = (V + tv_eff - 1) // tv_eff
    kernel = _make_tiled_kernel(Cv, C, T, B, V, tv_eff, mxu_dtype)
    return pl.pallas_call(
        kernel,
        out_shape=jax.ShapeDtypeStruct((V, N), out_dtype),
        grid_spec=pltpu.PrefetchScalarGridSpec(
            num_scalar_prefetch=0,
            grid=(2, grid_v),
            in_specs=[pl.BlockSpec((Cv, tv_eff, E), lambda ph, i: (0, i, 0)),
                      pl.BlockSpec((CT, E), lambda ph, i: (0, 0)),
                      pl.BlockSpec((T, N), lambda ph, i: (0, 0))],
            # stats sweep keeps the output window parked on block 0 (never
            # flushed); the apply sweep writes block i which is flushed on the
            # next index change / at grid end.
            out_specs=pl.BlockSpec((tv_eff, N), lambda ph, i: (ph * i, 0)),
            scratch_shapes=[pltpu.VMEM((C, 1, T), jnp.float32),   # running max m
                            pltpu.VMEM((C, 1, T), jnp.float32)]), # running sum z
        compiler_params=cparams,
    )(mu_v_g, mu_c_s, x)


def gauss_softmax_v3_forward(x, t, mu_v, log_sigma_v, mu_c, log_sigma_c,
                             global_flag=False, *, tv=_DEFAULT_TV,
                             mxu_dtype=jnp.bfloat16):
    """Pallas equivalent of GaussSoftmaxV3.forward.

    mxu_dtype=jnp.bfloat16 stages the MXU operands in bf16 (f32 accumulation);
    pass mxu_dtype=None for bit-faithful f32 matmul semantics.
    """
    # TODO(synk): the torch module clamps log_sigma_v / log_sigma_c (and mu_*)
    # in place on the Parameters; that persisted parameter side effect has no
    # influence on the returned tensor and is not reproduced here.  The mu_v /
    # mu_c clamps that DO affect the output are applied inside the kernels.
    del log_sigma_v, log_sigma_c
    del t  # t only selects whether mu_v is shared (2-D) or per-group (3-D).

    if global_flag:
        T, _ = mu_c.shape
        D = x.shape[-1]
        x2 = x.reshape(-1, D)
        if x2.shape[0] != T:
            raise ValueError("x.view(-1, D) must have T rows for the projection")
        return _fused_softmax_project(mu_v[None], mu_c, x2, C=1, T=T,
                                      tv=tv, mxu_dtype=mxu_dtype)        # (V, D)

    C, T, E = mu_c.shape
    mu_v_g = mu_v[None] if mu_v.ndim == 2 else mu_v                      # (Cv, V, E)
    if x.shape[0] != T or x.shape[1] % C != 0:
        raise ValueError("x must be (T, C*B) for the non-global branch")
    mu_c_s = mu_c.reshape(C * T, E)          # merge leading dims: free reshape
    return _fused_softmax_project(mu_v_g, mu_c_s, x, C=C, T=T,
                                  tv=tv, mxu_dtype=mxu_dtype)            # (V, C*B)


# --------------------------------------------------------------------------- #
# plain-JAX reference (mirrors the optional bf16 MXU staging for fair checks)
# --------------------------------------------------------------------------- #
def _reference_forward(x, mu_v, mu_c, global_flag, mxu_dtype=None):
    cast = (lambda a: a) if mxu_dtype is None else (lambda a: a.astype(mxu_dtype))
    mu_v_c = cast(jnp.clip(mu_v.astype(jnp.float32), -_MU_CLIP, _MU_CLIP))
    mu_c_c = cast(jnp.clip(mu_c.astype(jnp.float32), -_MU_CLIP, _MU_CLIP))
    if global_flag:
        logits = jnp.einsum('ve,te->vt', mu_v_c, mu_c_c,
                            preferred_element_type=jnp.float32)
        w = jax.nn.softmax(logits, axis=0)
        out = jnp.einsum('vt,td->vd', cast(w), cast(x.reshape(-1, x.shape[-1])),
                         preferred_element_type=jnp.float32)
        return out.astype(x.dtype)
    C, T, _ = mu_c.shape
    mv = mu_v_c if mu_v_c.ndim == 3 else jnp.broadcast_to(mu_v_c[None],
                                                          (C,) + mu_v_c.shape)
    logits = jnp.einsum('cve,cte->cvt', mv, mu_c_c,
                        preferred_element_type=jnp.float32)
    w = jax.nn.softmax(logits, axis=1)                                   # (C, V, T)
    B = x.shape[1] // C
    xg = x.reshape(T, C, B).transpose(1, 0, 2)                           # (C, T, B)
    out = jnp.einsum('cvt,ctb->cvb', cast(w), cast(xg),
                     preferred_element_type=jnp.float32)                 # (C, V, B)
    return out.transpose(1, 0, 2).reshape(-1, C * B).astype(x.dtype)     # (V, C*B)


# --------------------------------------------------------------------------- #
# self-test
# --------------------------------------------------------------------------- #
if __name__ == "__main__":
    key = jax.random.PRNGKey(0)
    k1, k2, k3, k4, k5, k6 = jax.random.split(key, 6)

    # Small module-consistent shapes: vocab=40, topics=16, emb=32.
    V, T, E = 40, 16, 32
    C, B = 2, 4          # non-global branch: C mu_c groups, x has C*B columns
    D = 24               # global-branch feature dim

    mu_v = jax.random.normal(k1, (V, E), jnp.float32)
    mu_v_pg = jax.random.normal(k6, (C, V, E), jnp.float32)       # t != 0 variant
    mu_c_grp = jax.random.normal(k2, (C, T, E), jnp.float32)
    mu_c_glb = jax.random.normal(k3, (T, E), jnp.float32)
    x_ng = jax.random.normal(k4, (T, C * B), jnp.float32)
    x_gl = jax.random.normal(k5, (T, D), jnp.float32)
    lsv = jnp.zeros((V, E), jnp.float32)
    lsc = jnp.zeros((T, E), jnp.float32)

    # 1) non-global, t == 0 (shared mu_v), exact f32 MXU path, single fused tile.
    y1 = jax.block_until_ready(gauss_softmax_v3_forward(
        x_ng, 0, mu_v, lsv, mu_c_grp, lsc, global_flag=False, mxu_dtype=None))
    r1 = _reference_forward(x_ng, mu_v, mu_c_grp, False, mxu_dtype=None)
    assert y1.shape == (V, C * B)
    assert jnp.allclose(y1, r1, rtol=1e-4, atol=1e-5)

    # 2) same, default bf16-staged MXU (compared against a bf16-staged reference).
    y2 = jax.block_until_ready(gauss_softmax_v3_forward(
        x_ng, 0, mu_v, lsv, mu_c_grp, lsc, global_flag=False))
    r2 = _reference_forward(x_ng, mu_v, mu_c_grp, False, mxu_dtype=jnp.bfloat16)
    assert jnp.allclose(y2, r2, rtol=1e-2, atol=1e-2)

    # 3) non-global, t != 0 (per-group mu_v), exact f32 path.
    y3 = jax.block_until_ready(gauss_softmax_v3_forward(
        x_ng, 1, mu_v_pg, lsv, mu_c_grp, lsc, global_flag=False, mxu_dtype=None))
    r3 = _reference_forward(x_ng, mu_v_pg, mu_c_grp, False, mxu_dtype=None)
    assert y3.shape == (V, C * B)
    assert jnp.allclose(y3, r3, rtol=1e-4, atol=1e-5)

    # 4) global branch; tiny tv forces the two-phase V-tiled kernel + ragged tail.
    y4 = jax.block_until_ready(gauss_softmax_v3_forward(
        x_gl, 0, mu_v, lsv, mu_c_glb, lsc, global_flag=True, tv=16, mxu_dtype=None))
    r4 = _reference_forward(x_gl, mu_v, mu_c_glb, True, mxu_dtype=None)
    assert y4.shape == (V, D)
    assert jnp.allclose(y4, r4, rtol=1e-4, atol=1e-5)

    # 5) global branch, tiled path with bf16-staged MXU.
    y5 = jax.block_until_ready(gauss_softmax_v3_forward(
        x_gl, 0, mu_v, lsv, mu_c_glb, lsc, global_flag=True, tv=16))
    r5 = _reference_forward(x_gl, mu_v, mu_c_glb, True, mxu_dtype=jnp.bfloat16)
    assert jnp.allclose(y5, r5, rtol=1e-2, atol=1e-2)

    print("KERNEL_OK")
</pallas_src>

<mosaic_0001>
module attributes {stable_mosaic.version = 11 : i64} {
  func.func @kernel(%arg0: i32, %arg1: memref<1x40x32xf32, #tpu.memory_space<vmem>>, %arg2: memref<32x32xf32, #tpu.memory_space<vmem>>, %arg3: memref<16x8xf32, #tpu.memory_space<vmem>>, %arg4: memref<40x8xf32, #tpu.memory_space<vmem>>) attributes {dimension_semantics = [#tpu.dimension_semantics<arbitrary>], iteration_bounds = array<i64: 1>, scalar_prefetch = 0 : i64, scratch_operands = 0 : i64, tpu.core_type = #tpu.core_type<tc>, window_params = [{pipeline_mode = #tpu.pipeline_mode<synchronous>, transform_indices = @transform_0, window_bounds = array<i64: 1, 40, 32>}, {pipeline_mode = #tpu.pipeline_mode<synchronous>, transform_indices = @transform_1, window_bounds = array<i64: 32, 32>}, {pipeline_mode = #tpu.pipeline_mode<synchronous>, transform_indices = @transform_2, window_bounds = array<i64: 16, 8>}, {pipeline_mode = #tpu.pipeline_mode<synchronous>, transform_indices = @transform_3, window_bounds = array<i64: 40, 8>}]} {
    %c0 = arith.constant 0 : index
    %c0_0 = arith.constant 0 : index
    %0 = vector.load %arg2[%c0, %c0_0] : memref<32x32xf32, #tpu.memory_space<vmem>>, vector<32x32xf32>
    %cst = arith.constant -1.41421354 : f32
    %cst_1 = arith.constant 1.41421354 : f32
    %1 = vector.broadcast %cst : f32 to vector<32x32xf32>
    %2 = arith.maximumf %1, %0 : vector<32x32xf32>
    %3 = vector.broadcast %cst_1 : f32 to vector<32x32xf32>
    %4 = arith.minimumf %3, %2 : vector<32x32xf32>
    %c0_2 = arith.constant 0 : index
    %c0_3 = arith.constant 0 : index
    %c0_4 = arith.constant 0 : index
    %5 = vector.load %arg1[%c0_2, %c0_3, %c0_4] : memref<1x40x32xf32, #tpu.memory_space<vmem>>, vector<1x40x32xf32>
    %6 = vector.shape_cast %5 : vector<1x40x32xf32> to vector<40x32xf32>
    %cst_5 = arith.constant -1.41421354 : f32
    %cst_6 = arith.constant 1.41421354 : f32
    %7 = vector.broadcast %cst_5 : f32 to vector<40x32xf32>
    %8 = arith.maximumf %7, %6 : vector<40x32xf32>
    %9 = vector.broadcast %cst_6 : f32 to vector<40x32xf32>
    %10 = arith.minimumf %9, %8 : vector<40x32xf32>
    %cst_7 = arith.constant dense<0.000000e+00> : vector<40x32xf32>
    %11 = tpu.matmul %10, %4, %cst_7 {dimension_numbers = #tpu.dot_dimension_numbers<[1], [1], [0], [0], [0, 0, 1, 0], [], []>} : vector<40x32xf32>, vector<32x32xf32>, vector<40x32xf32> -> vector<40x32xf32>
    %12 = vector.extract_strided_slice %11 {offsets = [0, 0], sizes = [40, 16], strides = [1, 1]} : vector<40x32xf32> to vector<40x16xf32>
    %13 = vector.extract_strided_slice %11 {offsets = [0, 16], sizes = [40, 16], strides = [1, 1]} : vector<40x32xf32> to vector<40x16xf32>
    %c0_8 = arith.constant 0 : index
    %c0_9 = arith.constant 0 : index
    %14 = vector.load %arg3[%c0_8, %c0_9] : memref<16x8xf32, #tpu.memory_space<vmem>>, vector<16x8xf32>
    %cst_10 = arith.constant dense<0xFF800000> : vector<16xf32>
    %15 = vector.multi_reduction <maximumf>, %12, %cst_10 [0] : vector<40x16xf32> to vector<16xf32>
    %16 = vector.shape_cast %15 : vector<16xf32> to vector<1x16xf32>
    %17 = vector.broadcast %16 : vector<1x16xf32> to vector<40x16xf32>
    %18 = arith.subf %12, %17 : vector<40x16xf32>
    %19 = math.exp %18 : vector<40x16xf32>
    %cst_11 = arith.constant dense<0.000000e+00> : vector<16xf32>
    %20 = vector.multi_reduction <add>, %19, %cst_11 [0] : vector<40x16xf32> to vector<16xf32>
    %21 = vector.shape_cast %20 : vector<16xf32> to vector<1x16xf32>
    %cst_12 = arith.constant 1.000000e+00 : f32
    %22 = vector.broadcast %cst_12 : f32 to vector<1x16xf32>
    %23 = arith.divf %22, %21 : vector<1x16xf32>
    %24 = vector.broadcast %23 : vector<1x16xf32> to vector<40x16xf32>
    %25 = arith.mulf %19, %24 : vector<40x16xf32>
    %26 = vector.extract_strided_slice %14 {offsets = [0, 0], sizes = [16, 4], strides = [1, 1]} : vector<16x8xf32> to vector<16x4xf32>
    %cst_13 = arith.constant dense<0.000000e+00> : vector<40x4xf32>
    %27 = tpu.matmul %25, %26, %cst_13 {dimension_numbers = #tpu.dot_dimension_numbers<[1], [0], [0], [1], [0, 0, 1, 1], [], []>} : vector<40x16xf32>, vector<16x4xf32>, vector<40x4xf32> -> vector<40x4xf32>
    %c0_14 = arith.constant 0 : index
    %c0_15 = arith.constant 0 : index
    %28 = vector.load %arg4[%c0_14, %c0_15] : memref<40x8xf32, #tpu.memory_space<vmem>>, vector<40x4xf32>
    tpu.vector_store %arg4[%c0_14, %c0_15], %27 {strides = array<i32>} : memref<40x8xf32, #tpu.memory_space<vmem>>, vector<40x4xf32>,
    %cst_16 = arith.constant dense<0xFF800000> : vector<16xf32>
    %29 = vector.multi_reduction <maximumf>, %13, %cst_16 [0] : vector<40x16xf32> to vector<16xf32>
    %30 = vector.shape_cast %29 : vector<16xf32> to vector<1x16xf32>
    %31 = vector.broadcast %30 : vector<1x16xf32> to vector<40x16xf32>
    %32 = arith.subf %13, %31 : vector<40x16xf32>
    %33 = math.exp %32 : vector<40x16xf32>
    %cst_17 = arith.constant dense<0.000000e+00> : vector<16xf32>
    %34 = vector.multi_reduction <add>, %33, %cst_17 [0] : vector<40x16xf32> to vector<16xf32>
    %35 = vector.shape_cast %34 : vector<16xf32> to vector<1x16xf32>
    %cst_18 = arith.constant 1.000000e+00 : f32
    %36 = vector.broadcast %cst_18 : f32 to vector<1x16xf32>
    %37 = arith.divf %36, %35 : vector<1x16xf32>
    %38 = vector.broadcast %37 : vector<1x16xf32> to vector<40x16xf32>
    %39 = arith.mulf %33, %38 : vector<40x16xf32>
    %40 = vector.extract_strided_slice %14 {offsets = [0, 4], sizes = [16, 4], strides = [1, 1]} : vector<16x8xf32> to vector<16x4xf32>
    %cst_19 = arith.constant dense<0.000000e+00> : vector<40x4xf32>
    %41 = tpu.matmul %39, %40, %cst_19 {dimension_numbers = #tpu.dot_dimension_numbers<[1], [0], [0], [1], [0, 0, 1, 1], [], []>} : vector<40x16xf32>, vector<16x4xf32>, vector<40x4xf32> -> vector<40x4xf32>
    %c0_20 = arith.constant 0 : index
    %c4 = arith.constant 4 : index
    %42 = vector.load %arg4[%c0_20, %c4] : memref<40x8xf32, #tpu.memory_space<vmem>>, vector<40x4xf32>
    tpu.vector_store %arg4[%c0_20, %c4], %41 {strides = array<i32>} : memref<40x8xf32, #tpu.memory_space<vmem>>, vector<40x4xf32>,
    return
  }
  func.func @transform_0(%arg0: i32) -> (i32, i32, i32) {
    %c0_i32 = arith.constant 0 : i32
    %c0_i32_0 = arith.constant 0 : i32
    %c0_i32_1 = arith.constant 0 : i32
    %c0_i32_2 = arith.constant 0 : i32
    return %c0_i32, %c0_i32_0, %c0_i32_1 : i32, i32, i32
  }
  func.func @transform_1(%arg0: i32) -> (i32, i32) {
    %c0_i32 = arith.constant 0 : i32
    %c0_i32_0 = arith.constant 0 : i32
    %c0_i32_1 = arith.constant 0 : i32
    return %c0_i32, %c0_i32_0 : i32, i32
  }
  func.func @transform_2(%arg0: i32) -> (i32, i32) {
    %c0_i32 = arith.constant 0 : i32
    %c0_i32_0 = arith.constant 0 : i32
    %c0_i32_1 = arith.constant 0 : i32
    return %c0_i32, %c0_i32_0 : i32, i32
  }
  func.func @transform_3(%arg0: i32) -> (i32, i32) {
    %c0_i32 = arith.constant 0 : i32
    %c0_i32_0 = arith.constant 0 : i32
    %c0_i32_1 = arith.constant 0 : i32
    return %c0_i32, %c0_i32_0 : i32, i32
  }
}

</mosaic_0001>

<llo_original>
// kernel: tpu_custom_call.1
$region0: #{tpu_custom_call.1}
  #allocation0 [shape = 'u32[]', space=smem, size = 0x4, offset = 0x4, fixed_abs, tag = 'smem constant byte address 0x4 - core index']
  #allocation1 [shape = 'u32[72,128]{1,0:T(1,128)}', space=vmem, size = 0x9000, scoped, tag = 'internal scratch']
  %s0 = inlined_call_operand.vmem [shape: f32[1,40,32], index: 0, kind: input, shape index: {}]
  %s1 = inlined_call_operand.vmem [shape: f32[32,32], index: 1, kind: input, shape index: {}]
  %s2 = inlined_call_operand.vmem [shape: f32[16,8], index: 2, kind: input, shape index: {}]
  %s3 = inlined_call_operand.vmem [shape: f32[40,8], index: 3, kind: output, shape index: {}]
  %s4 = sld [smem:[#allocation0]]
  $region22: #{tpu_custom_call.1} parent=0
    _
  %s6 = ssub.s32 1, %s4
  %s7 = scalar_select 0, %s6, %s4
  // Predicated region
  $region2: #{tpu_custom_call.1} parent=0 // pred_check
    _
  $region3: #{tpu_custom_call.1} parent=0 // pred_check_branch
    %9 = sbr.rel (0) target = $region5
  $region4: #{tpu_custom_call.1} parent=0 // pred_region
    _
  $region5: #{tpu_custom_call.1} parent=0 // pred_fallthru
    _
  // Predicated region
  $region6: #{tpu_custom_call.1} parent=0 // pred_check
    _
  $region7: #{tpu_custom_call.1} parent=0 // pred_check_branch
    %11 = sbr.rel (0) target = $region9
  $region8: #{tpu_custom_call.1} parent=0 // pred_region
    _
  $region9: #{tpu_custom_call.1} parent=0 // pred_fallthru
    _
  // Predicated region
  $region10: #{tpu_custom_call.1} parent=0 // pred_check
    _
  $region11: #{tpu_custom_call.1} parent=0 // pred_check_branch
    %13 = sbr.rel (0) target = $region13
  $region12: #{tpu_custom_call.1} parent=0 // pred_region
    _
  $region13: #{tpu_custom_call.1} parent=0 // pred_fallthru
    _
  %v14 = vld [vmem:[%s1] sm:$0xff]
  %v15 = vld [vmem:[%s1 + $0x8] sm:$0xff]
  %v16 = vld [vmem:[%s1 + $0x10] sm:$0xff]
  %v17 = vld [vmem:[%s1 + $0x18] sm:$0xff]
  %v18 = vmax.f32 %v14, -1.4142135
  %v19 = vmax.f32 %v15, -1.4142135
  %v20 = vmax.f32 %v16, -1.4142135
  %v21 = vmax.f32 %v17, -1.4142135
  %v22 = vmin.f32 %v18, 1.4142135
  %v23 = vmin.f32 %v19, 1.4142135
  %v24 = vmin.f32 %v20, 1.4142135
  %v25 = vmin.f32 %v21, 1.4142135
  %v26 = vld [vmem:[%s0] sm:$0xff]
  %v27 = vld [vmem:[%s0 + $0x8] sm:$0xff]
  %v28 = vld [vmem:[%s0 + $0x10] sm:$0xff]
  %v29 = vld [vmem:[%s0 + $0x18] sm:$0xff]
  %v30 = vld [vmem:[%s0 + $0x20] sm:$0xff]
  %v31 = vmax.f32 %v26, -1.4142135
  %v32 = vmax.f32 %v27, -1.4142135
  %v33 = vmax.f32 %v28, -1.4142135
  %v34 = vmax.f32 %v29, -1.4142135
  %v35 = vmax.f32 %v30, -1.4142135
  %v36 = vmin.f32 %v31, 1.4142135
  %v37 = vmin.f32 %v32, 1.4142135
  %v38 = vmin.f32 %v33, 1.4142135
  %v39 = vmin.f32 %v34, 1.4142135
  %v40 = vmin.f32 %v35, 1.4142135
  %vm41 = vcmask 261120
  %v43 = vsel %vm41, %v36, 0
  %v46 = vsel %vm41, %v37, 0
  %v49 = vsel %vm41, %v38, 0
  %v52 = vsel %vm41, %v39, 0
  %v55 = vsel %vm41, %v40, 0
  %v58 = vsel %vm41, %v22, 0
  %v61 = vsel %vm41, %v23, 0
  %v64 = vsel %vm41, %v24, 0
  %v67 = vsel %vm41, %v25, 0
  %69 = vmatpush.xpose.msra.mxu0 0.0
  %70 = vmatpush.xpose.msra.mxu0 0.0
  %71 = vmatpush.xpose.msra.mxu0 0.0
  %72 = vmatpush.xpose.msra.mxu0 0.0
  %73 = vmatpush.xpose.msra.mxu0 0.0
  %74 = vmatpush.xpose.msra.mxu0 0.0
  %75 = vmatpush.xpose.msra.mxu0 0.0
  %76 = vmatpush.xpose.msra.mxu0 0.0
  %77 = vmatpush.xpose.msra.mxu0 0.0
  %78 = vmatpush.xpose.msra.mxu0 0.0
  %79 = vmatpush.xpose.msra.mxu0 0.0
  %80 = vmatpush.xpose.msra.mxu0 0.0
  %81 = vmatpush.xpose.msra.mxu0 %v67
  %82 = vmatpush.xpose.msra.mxu0 %v64
  %83 = vmatpush.xpose.msra.mxu0 %v61
  %84 = vmatpush.xpose.msra.mxu0 %v58
  %85 = vmatmul.f32.gmra.mxu0 %v43
  %v86 = vpop.f32.mrf.mxu0
  %v87 = vadd.f32 0.0, %v86
  %88 = vmatmul.f32.gmra.mxu0 %v46
  %v89 = vpop.f32.mrf.mxu0
  %v90 = vadd.f32 0.0, %v89
  %91 = vmatmul.f32.gmra.mxu0 %v49
  %v92 = vpop.f32.mrf.mxu0
  %v93 = vadd.f32 0.0, %v92
  %94 = vmatmul.f32.gmra.mxu0 %v52
  %v95 = vpop.f32.mrf.mxu0
  %v96 = vadd.f32 0.0, %v95
  %97 = vmatmul.f32.gmra.mxu0 %v55
  %v98 = vpop.f32.mrf.mxu0
  %v99 = vadd.f32 0.0, %v98
  %100 = vdwg.mxu0
  %v101 = vld [vmem:[%s2] sm:$0xff]
  %v102 = vld [vmem:[%s2 + $0x8] sm:$0xff]
  %vm103 = vcmask 130048
  %v104 = vsel %vm103, %v87, -inf
  %v105 = vsel %vm103, %v90, -inf
  %v106 = vsel %vm103, %v93, -inf
  %v107 = vsel %vm103, %v96, -inf
  %v108 = vsel %vm103, %v99, -inf
  %v109 = vmax.f32 %v104, %v108
  %v110 = vmax.f32 %v109, %v105
  %v111 = vmax.f32 %v106, %v107
  %v112 = vmax.f32 %v110, %v111
  %v113 = vrot.slane %v112, 4
  %v114 = vmax.f32 %v112, %v113
  %v115 = vrot.slane %v114, 2
  %v116 = vmax.f32 %v114, %v115
  %v117 = vrot.slane %v116, 1
  %v118 = vmax.f32 %v116, %v117
  %v119 = vsub.f32 %v87, %v118
  %v120 = vsub.f32 %v90, %v118
  %v121 = vsub.f32 %v93, %v118
  %v122 = vsub.f32 %v96, %v118
  %v123 = vsub.f32 %v99, %v118
  %v124 = vmul.f32 %v119, 1.442695
  %v125 = vpow.pop %v124
  %v126 = vmul.f32 %v120, 1.442695
  %v127 = vpow.pop %v126
  %v128 = vmul.f32 %v121, 1.442695
  %v129 = vpow.pop %v128
  %v130 = vmul.f32 %v122, 1.442695
  %v131 = vpow.pop %v130
  %v132 = vmul.f32 %v123, 1.442695
  %v133 = vpow.pop %v132
  %v134 = vsel %vm103, %v125, 0.0
  %v135 = vsel %vm103, %v127, 0.0
  %v136 = vadd.f32 %v134, %v135
  %v137 = vsel %vm103, %v129, 0.0
  %v138 = vadd.f32 %v136, %v137
  %v139 = vsel %vm103, %v131, 0.0
  %v140 = vadd.f32 %v138, %v139
  %v141 = vsel %vm103, %v133, 0.0
  %v142 = vadd.f32 %v140, %v141
  %v143 = vrot.slane %v142, 4
  %v144 = vadd.f32 %v142, %v143
  %v145 = vrot.slane %v144, 2
  %v146 = vadd.f32 %v144, %v145
  %v147 = vrot.slane %v146, 1
  %v148 = vadd.f32 %v146, %v147
  %v149 = vrcp.pop %v148
  %v150 = vmul.f32 %v148, %v149
  %v151 = vsub.f32 1.0, %v150
  %v152 = vmul.f32 %v149, %v151
  %v153 = vadd.f32 %v149, %v152
  %vm154 = vweird.f32 %v148
  %vm155 = vweird.f32 %v149
  %vm156 = vmor %vm154, %vm155
  %v157 = vsel %vm156, %v149, %v153
  %v158 = vand.u32 2147483647, %v148
  %vm159 = vcmp.eq.f32.partialorder %v158, 8.507059e+37
  %v160 = vand.u32 %v148, 2147483648
  %v161 = vor.u32 1.1754944e-38, %v160
  %v162 = vsel %vm159, %v161, %v157
  %v163 = vmul.f32 1.0, %v162
  %v164 = vmul.f32 %v125, %v163
  %v165 = vmul.f32 %v127, %v163
  %v166 = vmul.f32 %v129, %v163
  %v167 = vmul.f32 %v131, %v163
  %v168 = vmul.f32 %v133, %v163
  %v170 = vsel %vm103, %v164, 0
  %v173 = vsel %vm103, %v165, 0
  %v176 = vsel %vm103, %v166, 0
  %v179 = vsel %vm103, %v167, 0
  %v182 = vsel %vm103, %v168, 0
  %184 = vmatpush.msra.mxu0 0.0
  %185 = vmatpush.msra.mxu0 0.0
  %186 = vmatpush.msra.mxu0 0.0
  %187 = vmatpush.msra.mxu0 0.0
  %188 = vmatpush.msra.mxu0 0.0
  %189 = vmatpush.msra.mxu0 0.0
  %190 = vmatpush.msra.mxu0 0.0
  %191 = vmatpush.msra.mxu0 0.0
  %192 = vmatpush.msra.mxu0 0.0
  %193 = vmatpush.msra.mxu0 0.0
  %194 = vmatpush.msra.mxu0 0.0
  %195 = vmatpush.msra.mxu0 0.0
  %196 = vmatpush.msra.mxu0 0.0
  %197 = vmatpush.msra.mxu0 0.0
  %198 = vmatpush.msra.mxu0 %v102
  %199 = vmatpush.msra.mxu0 %v101
  %200 = vmatmul.f32.gmra.mxu0 %v170
  %v201 = vpop.f32.mrf.mxu0
  %v202 = vadd.f32 0.0, %v201
  %203 = vmatmul.f32.gmra.mxu0 %v173
  %v204 = vpop.f32.mrf.mxu0
  %v205 = vadd.f32 0.0, %v204
  %206 = vmatmul.f32.gmra.mxu0 %v176
  %v207 = vpop.f32.mrf.mxu0
  %v208 = vadd.f32 0.0, %v207
  %209 = vmatmul.f32.gmra.mxu0 %v179
  %v210 = vpop.f32.mrf.mxu0
  %v211 = vadd.f32 0.0, %v210
  %212 = vmatmul.f32.gmra.mxu0 %v182
  %v213 = vpop.f32.mrf.mxu0
  %v214 = vadd.f32 0.0, %v213
  %215 = vdwg.mxu0
  %vm216 = vcmask 31744
  %217 = vst.msk [vmem:[%s3] sm:$0xff] %vm216, %v202
  %218 = vst.msk [vmem:[%s3 + $0x8] sm:$0xff] %vm216, %v205
  %219 = vst.msk [vmem:[%s3 + $0x10] sm:$0xff] %vm216, %v208
  %220 = vst.msk [vmem:[%s3 + $0x18] sm:$0xff] %vm216, %v211
  %221 = vst.msk [vmem:[%s3 + $0x20] sm:$0xff] %vm216, %v214
  %vm222 = vcmask 261248
  %v223 = vsel %vm222, %v87, -inf
  %v224 = vsel %vm222, %v90, -inf
  %v225 = vsel %vm222, %v93, -inf
  %v226 = vsel %vm222, %v96, -inf
  %v227 = vsel %vm222, %v99, -inf
  %v228 = vmax.f32 %v223, %v227
  %v229 = vmax.f32 %v228, %v224
  %v230 = vmax.f32 %v225, %v226
  %v231 = vmax.f32 %v229, %v230
  %v232 = vrot.slane %v231, 4
  %v233 = vmax.f32 %v231, %v232
  %v234 = vrot.slane %v233, 2
  %v235 = vmax.f32 %v233, %v234
  %v236 = vrot.slane %v235, 1
  %v237 = vmax.f32 %v235, %v236
  %v238 = vsub.f32 %v87, %v237
  %v239 = vsub.f32 %v90, %v237
  %v240 = vsub.f32 %v93, %v237
  %v241 = vsub.f32 %v96, %v237
  %v242 = vsub.f32 %v99, %v237
  %v243 = vmul.f32 %v238, 1.442695
  %v244 = vpow.pop %v243
  %v245 = vmul.f32 %v239, 1.442695
  %v246 = vpow.pop %v245
  %v247 = vmul.f32 %v240, 1.442695
  %v248 = vpow.pop %v247
  %v249 = vmul.f32 %v241, 1.442695
  %v250 = vpow.pop %v249
  %v251 = vmul.f32 %v242, 1.442695
  %v252 = vpow.pop %v251
  %v253 = vsel %vm222, %v244, 0.0
  %v254 = vsel %vm222, %v246, 0.0
  %v255 = vadd.f32 %v253, %v254
  %v256 = vsel %vm222, %v248, 0.0
  %v257 = vadd.f32 %v255, %v256
  %v258 = vsel %vm222, %v250, 0.0
  %v259 = vadd.f32 %v257, %v258
  %v260 = vsel %vm222, %v252, 0.0
  %v261 = vadd.f32 %v259, %v260
  %v262 = vrot.slane %v261, 4
  %v263 = vadd.f32 %v261, %v262
  %v264 = vrot.slane %v263, 2
  %v265 = vadd.f32 %v263, %v264
  %v266 = vrot.slane %v265, 1
  %v267 = vadd.f32 %v265, %v266
  %v268 = vrcp.pop %v267
  %v269 = vmul.f32 %v267, %v268
  %v270 = vsub.f32 1.0, %v269
  %v271 = vmul.f32 %v268, %v270
  %v272 = vadd.f32 %v268, %v271
  %vm273 = vweird.f32 %v267
  %vm274 = vweird.f32 %v268
  %vm275 = vmor %vm273, %vm274
  %v276 = vsel %vm275, %v268, %v272
  %v277 = vand.u32 2147483647, %v267
  %vm278 = vcmp.eq.f32.partialorder %v277, 8.507059e+37
  %v279 = vand.u32 %v267, 2147483648
  %v280 = vor.u32 1.1754944e-38, %v279
  %v281 = vsel %vm278, %v280, %v276
  %v282 = vmul.f32 1.0, %v281
  %v283 = vmul.f32 %v244, %v282
  %v284 = vmul.f32 %v246, %v282
  %v285 = vmul.f32 %v248, %v282
  %v286 = vmul.f32 %v250, %v282
  %v287 = vmul.f32 %v252, %v282
  %293 = vrot.lane.b32.xlu0 %v283, 112
  %v294 = vpop.permute.xlu0 %293
  %295 = vrot.lane.b32.xlu0 %v284, 112
  %v296 = vpop.permute.xlu0 %295
  %297 = vrot.lane.b32.xlu0 %v285, 112
  %v298 = vpop.permute.xlu0 %297
  %299 = vrot.lane.b32.xlu0 %v286, 112
  %v300 = vpop.permute.xlu0 %299
  %301 = vrot.lane.b32.xlu0 %v287, 112
  %v302 = vpop.permute.xlu0 %301
  %305 = vrot.lane.b32.xlu0 %v101, 124
  %v306 = vpop.permute.xlu0 %305
  %307 = vrot.lane.b32.xlu0 %v102, 124
  %v308 = vpop.permute.xlu0 %307
  %v311 = vsel %vm103, %v294, 0
  %v313 = vsel %vm103, %v296, 0
  %v315 = vsel %vm103, %v298, 0
  %v317 = vsel %vm103, %v300, 0
  %v319 = vsel %vm103, %v302, 0
  %321 = vmatpush.msra.mxu0 0.0
  %322 = vmatpush.msra.mxu0 0.0
  %323 = vmatpush.msra.mxu0 0.0
  %324 = vmatpush.msra.mxu0 0.0
  %325 = vmatpush.msra.mxu0 0.0
  %326 = vmatpush.msra.mxu0 0.0
  %327 = vmatpush.msra.mxu0 0.0
  %328 = vmatpush.msra.mxu0 0.0
  %329 = vmatpush.msra.mxu0 0.0
  %330 = vmatpush.msra.mxu0 0.0
  %331 = vmatpush.msra.mxu0 0.0
  %332 = vmatpush.msra.mxu0 0.0
  %333 = vmatpush.msra.mxu0 0.0
  %334 = vmatpush.msra.mxu0 0.0
  %335 = vmatpush.msra.mxu0 %v308
  %336 = vmatpush.msra.mxu0 %v306
  %337 = vmatmul.f32.gmra.mxu0 %v311
  %v338 = vpop.f32.mrf.mxu0
  %v339 = vadd.f32 0.0, %v338
  %340 = vmatmul.f32.gmra.mxu0 %v313
  %v341 = vpop.f32.mrf.mxu0
  %v342 = vadd.f32 0.0, %v341
  %343 = vmatmul.f32.gmra.mxu0 %v315
  %v344 = vpop.f32.mrf.mxu0
  %v345 = vadd.f32 0.0, %v344
  %346 = vmatmul.f32.gmra.mxu0 %v317
  %v347 = vpop.f32.mrf.mxu0
  %v348 = vadd.f32 0.0, %v347
  %349 = vmatmul.f32.gmra.mxu0 %v319
  %v350 = vpop.f32.mrf.mxu0
  %v351 = vadd.f32 0.0, %v350
  %352 = vdwg.mxu0
  %358 = vrot.lane.b32.xlu0 %v339, 4
  %v359 = vpop.permute.xlu0 %358
  %360 = vrot.lane.b32.xlu0 %v342, 4
  %v361 = vpop.permute.xlu0 %360
  %362 = vrot.lane.b32.xlu0 %v345, 4
  %v363 = vpop.permute.xlu0 %362
  %364 = vrot.lane.b32.xlu0 %v348, 4
  %v365 = vpop.permute.xlu0 %364
  %366 = vrot.lane.b32.xlu0 %v351, 4
  %v367 = vpop.permute.xlu0 %366
  %vm373 = vcmask 64544
  %374 = vst.msk [vmem:[%s3] sm:$0xff] %vm373, %v359
  %375 = vst.msk [vmem:[%s3 + $0x8] sm:$0xff] %vm373, %v361
  %376 = vst.msk [vmem:[%s3 + $0x10] sm:$0xff] %vm373, %v363
  %377 = vst.msk [vmem:[%s3 + $0x18] sm:$0xff] %vm373, %v365
  %378 = vst.msk [vmem:[%s3 + $0x20] sm:$0xff] %vm373, %v367
  // Predicated region
  $region14: #{tpu_custom_call.1} parent=0 // pred_check
    _
  $region15: #{tpu_custom_call.1} parent=0 // pred_check_branch
    %380 = sbr.rel (0) target = $region17
  $region16: #{tpu_custom_call.1} parent=0 // pred_region
    _
  $region17: #{tpu_custom_call.1} parent=0 // pred_fallthru
    _
  // Predicated region
  $region18: #{tpu_custom_call.1} parent=0 // pred_check
    _
  $region19: #{tpu_custom_call.1} parent=0 // pred_check_branch
    %382 = sbr.rel (0) target = $region21
  $region20: #{tpu_custom_call.1} parent=0 // pred_region
    _
  $region21: #{tpu_custom_call.1} parent=0 // pred_fallthru
    _

</llo_original>
